<compile_context>
chip_gen: v5e
topology: v5e:2x2
jax: 0.10.0
libtpu: 0.0.40
codegen_flags: <defaults>
</compile_context>

<pallas_src>
import functools

import jax
import jax.numpy as jnp
from jax.experimental import pallas as pl
from jax.experimental.pallas import tpu as pltpu


def _round_up(x, m):
    return ((x + m - 1) // m) * m


def _cdiv(a, b):
    return (a + b - 1) // b


def dueling_dqn_kernel(
    x_ref,
    w1_ref, b1_ref,     # feature layer 1: input_size -> 128
    w2_ref, b2_ref,     # feature layer 2: 128 -> 64
    wh1_ref, bh1_ref,   # fused head layer 1: 64 -> 64 (adv cols 0:32 | val cols 32:64)
    wh2_ref, bh2_ref,   # fused block-diag head layer 2: 64 -> output_size + 1
    out_ref,
    *,
    output_size,
):
    cdt = w1_ref.dtype  # MXU input dtype (f32 or bf16); accumulation is always f32.

    # x arrives f32; any cast to bf16 happens in-kernel (VPU has slack) so the
    # wrapper never makes an extra HBM pass over x on the bf16 path.
    x = x_ref[...].astype(cdt)
    h1 = jnp.maximum(
        jnp.dot(x, w1_ref[...], preferred_element_type=jnp.float32) + b1_ref[...],
        0.0)
    h2 = jnp.maximum(
        jnp.dot(h1.astype(cdt), w2_ref[...], preferred_element_type=jnp.float32)
        + b2_ref[...], 0.0)

    # Fused advantage/value first layers: one (tb,64)x(64,64) matmul.
    heads1 = jnp.maximum(
        jnp.dot(h2.astype(cdt), wh1_ref[...], preferred_element_type=jnp.float32)
        + bh1_ref[...], 0.0)

    # Fused block-diagonal second layers:
    #   cols [0:output_size] -> advantage, col [output_size] -> value.
    head2 = (jnp.dot(heads1.astype(cdt), wh2_ref[...],
                     preferred_element_type=jnp.float32) + bh2_ref[...])

    adv = head2[:, :output_size]
    val = head2[:, output_size:output_size + 1]
    adv_mean = jnp.mean(adv, axis=1, keepdims=True)

    # Narrow store: only the real Q-values hit HBM (no lane padding, no
    # wrapper slice, no garbage columns).
    out_ref[...] = (adv + val - adv_mean).astype(out_ref.dtype)


def pack_params(params, compute_dtype=jnp.float32):
    """Fuse the advantage/value heads into two matmuls (PyTorch layout in)."""
    output_size = params["wa2"].shape[1]

    wh1 = jnp.concatenate([params["wa1"], params["wv1"]], axis=1)      # (64, 64)
    bh1 = jnp.concatenate([params["ba1"], params["bv1"]], axis=1)      # (1, 64)

    wh2 = jnp.zeros((64, output_size + 1), jnp.float32)                # block-diagonal
    wh2 = wh2.at[:32, :output_size].set(params["wa2"])
    wh2 = wh2.at[32:, output_size].set(params["wv2"][:, 0])
    bh2 = jnp.concatenate([params["ba2"], params["bv2"]], axis=1)      # (1, output_size+1)

    packed = dict(
        w1=params["w1"].astype(compute_dtype), b1=params["b1"].astype(jnp.float32),
        w2=params["w2"].astype(compute_dtype), b2=params["b2"].astype(jnp.float32),
        wh1=wh1.astype(compute_dtype),         bh1=bh1.astype(jnp.float32),
        wh2=wh2.astype(compute_dtype),         bh2=bh2.astype(jnp.float32),
    )
    return packed, output_size


def _choose_tile(batch, block_batch):
    """Batch tile: multiple of 8 (or == batch when batch < 8), never larger
    than the batch, and capped so the grid has >= 2 steps whenever there is
    enough work (keeps both v7x TensorCores busy; no-op on v5e/v6e)."""
    if batch < 8:
        return batch
    block_batch = max(8, _round_up(block_batch, 8))
    tb = min(block_batch, (batch // 8) * 8)
    if batch >= 16:
        tb = min(tb, _round_up(_cdiv(batch, 2), 8))
    return tb


def dueling_dqn_forward(x, params, *, block_batch=4096, compute_dtype=jnp.float32):
    """x: (B, input_size) float32; params: PyTorch-layout dict (see init_params).

    block_batch is sweepable (1024..8192); larger tiles amortize per-step
    overhead and easily fit the 48 MiB VMEM budget with the narrow output.
    """
    batch, input_size = x.shape
    packed, output_size = pack_params(params, compute_dtype)

    tb = _choose_tile(batch, block_batch)
    grid = (_cdiv(batch, tb),)  # ragged last tile: OOB reads ignored, OOB writes masked

    def resident_spec(arr):
        # Constant block index -> weight/bias DMA'd once, stays VMEM-resident.
        return pl.BlockSpec(arr.shape, lambda i: (0, 0))

    weight_args = (packed["w1"], packed["b1"], packed["w2"], packed["b2"],
                   packed["wh1"], packed["bh1"], packed["wh2"], packed["bh2"])

    in_specs = [pl.BlockSpec((tb, input_size), lambda i: (i, 0))]
    in_specs += [resident_spec(a) for a in weight_args]
    out_spec = pl.BlockSpec((tb, output_size), lambda i: (i, 0))

    kernel = functools.partial(dueling_dqn_kernel, output_size=output_size)

    return pl.pallas_call(
        kernel,
        out_shape=jax.ShapeDtypeStruct((batch, output_size), jnp.float32),
        grid=grid,
        in_specs=in_specs,
        out_specs=out_spec,
        compiler_params=pltpu.CompilerParams(
            dimension_semantics=("parallel",),       # 2-TC sharding on v7x
            vmem_limit_bytes=48 * 1024 * 1024,       # safe on v7x's 64 MiB core
        ),
    )(x, *weight_args)


def init_params(key, input_size, output_size):
    """Deterministic synthetic parameters (shapes match the PyTorch module)."""
    dims = {
        "w1": (input_size, 128), "b1": (1, 128),
        "w2": (128, 64),         "b2": (1, 64),
        "wa1": (64, 32),         "ba1": (1, 32),
        "wa2": (32, output_size), "ba2": (1, output_size),
        "wv1": (64, 32),         "bv1": (1, 32),
        "wv2": (32, 1),          "bv2": (1, 1),
    }
    params = {}
    keys = jax.random.split(key, len(dims))
    for k_rng, (name, shape) in zip(keys, dims.items()):
        scale = 1.0 / jnp.sqrt(jnp.float32(shape[0] if name.startswith("w") else 1.0))
        params[name] = scale * jax.random.normal(k_rng, shape, dtype=jnp.float32)
    return params


def reference_forward(x, p):
    """Pure-JAX reference mirroring the PyTorch forward."""
    h = jnp.maximum(x @ p["w1"] + p["b1"], 0.0)
    h = jnp.maximum(h @ p["w2"] + p["b2"], 0.0)
    a = jnp.maximum(h @ p["wa1"] + p["ba1"], 0.0)
    adv = a @ p["wa2"] + p["ba2"]
    v = jnp.maximum(h @ p["wv1"] + p["bv1"], 0.0)
    val = v @ p["wv2"] + p["bv2"]
    return val + adv - adv.mean(axis=1, keepdims=True)


if __name__ == "__main__":
    input_size, output_size = 16, 4

    key = jax.random.PRNGKey(0)
    k_x1, k_x2, k_p = jax.random.split(key, 3)
    params = init_params(k_p, input_size, output_size)

    # 1) tiny batch (< 8 rows): single tile equal to the full batch dim
    x1 = jax.random.normal(k_x1, (2, input_size), dtype=jnp.float32)
    out1 = jax.block_until_ready(dueling_dqn_forward(x1, params))
    ref1 = reference_forward(x1, params)
    assert out1.shape == (2, output_size)
    assert jnp.allclose(out1, ref1, atol=1e-4, rtol=1e-4), "mismatch (tiny batch)"

    # 2) batch not a multiple of the tile -> multi-step grid, ragged last tile
    x2 = jax.random.normal(k_x2, (200, input_size), dtype=jnp.float32)
    out2 = jax.block_until_ready(dueling_dqn_forward(x2, params, block_batch=64))
    ref2 = reference_forward(x2, params)
    assert out2.shape == (200, output_size)
    assert jnp.allclose(out2, ref2, atol=1e-4, rtol=1e-4), "mismatch (tiled batch)"

    # 3) default (large) tile, capped so the grid still has >= 2 steps
    out3 = jax.block_until_ready(dueling_dqn_forward(x2, params))
    assert jnp.allclose(out3, ref2, atol=1e-4, rtol=1e-4), "mismatch (default tile)"

    # 4) bf16 compute path (f32 accumulation, in-kernel cast) -> loose check
    out4 = jax.block_until_ready(
        dueling_dqn_forward(x2, params, compute_dtype=jnp.bfloat16))
    assert out4.shape == (200, output_size)
    assert jnp.allclose(out4, ref2, atol=0.25, rtol=0.25), "mismatch (bf16 path)"

    print("KERNEL_OK")
</pallas_src>

<mosaic_0001>
module attributes {stable_mosaic.version = 11 : i64} {
  func.func @dueling_dqn_kernel(%arg0: i32, %arg1: memref<2x16xf32, #tpu.memory_space<vmem>>, %arg2: memref<16x128xf32, #tpu.memory_space<vmem>>, %arg3: memref<1x128xf32, #tpu.memory_space<vmem>>, %arg4: memref<128x64xf32, #tpu.memory_space<vmem>>, %arg5: memref<1x64xf32, #tpu.memory_space<vmem>>, %arg6: memref<64x64xf32, #tpu.memory_space<vmem>>, %arg7: memref<1x64xf32, #tpu.memory_space<vmem>>, %arg8: memref<64x5xf32, #tpu.memory_space<vmem>>, %arg9: memref<1x5xf32, #tpu.memory_space<vmem>>, %arg10: memref<2x4xf32, #tpu.memory_space<vmem>>) attributes {dimension_semantics = [#tpu.dimension_semantics<parallel>], iteration_bounds = array<i64: 1>, scalar_prefetch = 0 : i64, scratch_operands = 0 : i64, tpu.core_type = #tpu.core_type<tc>, window_params = [{transform_indices = @transform_0, window_bounds = array<i64: 2, 16>}, {pipeline_mode = #tpu.pipeline_mode<synchronous>, transform_indices = @transform_1, window_bounds = array<i64: 16, 128>}, {pipeline_mode = #tpu.pipeline_mode<synchronous>, transform_indices = @transform_2, window_bounds = array<i64: 1, 128>}, {pipeline_mode = #tpu.pipeline_mode<synchronous>, transform_indices = @transform_3, window_bounds = array<i64: 128, 64>}, {pipeline_mode = #tpu.pipeline_mode<synchronous>, transform_indices = @transform_4, window_bounds = array<i64: 1, 64>}, {pipeline_mode = #tpu.pipeline_mode<synchronous>, transform_indices = @transform_5, window_bounds = array<i64: 64, 64>}, {pipeline_mode = #tpu.pipeline_mode<synchronous>, transform_indices = @transform_6, window_bounds = array<i64: 1, 64>}, {pipeline_mode = #tpu.pipeline_mode<synchronous>, transform_indices = @transform_7, window_bounds = array<i64: 64, 5>}, {pipeline_mode = #tpu.pipeline_mode<synchronous>, transform_indices = @transform_8, window_bounds = array<i64: 1, 5>}, {transform_indices = @transform_9, window_bounds = array<i64: 2, 4>}]} {
    %c0 = arith.constant 0 : index
    %c0_0 = arith.constant 0 : index
    %0 = vector.load %arg1[%c0, %c0_0] : memref<2x16xf32, #tpu.memory_space<vmem>>, vector<2x16xf32>
    %c0_1 = arith.constant 0 : index
    %c0_2 = arith.constant 0 : index
    %1 = vector.load %arg2[%c0_1, %c0_2] : memref<16x128xf32, #tpu.memory_space<vmem>>, vector<16x128xf32>
    %cst = arith.constant dense<0.000000e+00> : vector<2x128xf32>
    %2 = tpu.matmul %0, %1, %cst {dimension_numbers = #tpu.dot_dimension_numbers<[1], [0], [0], [1], [0, 0, 1, 1], [], []>} : vector<2x16xf32>, vector<16x128xf32>, vector<2x128xf32> -> vector<2x128xf32>
    %c0_3 = arith.constant 0 : index
    %c0_4 = arith.constant 0 : index
    %3 = vector.load %arg3[%c0_3, %c0_4] : memref<1x128xf32, #tpu.memory_space<vmem>>, vector<1x128xf32>
    %4 = vector.broadcast %3 : vector<1x128xf32> to vector<2x128xf32>
    %5 = arith.addf %2, %4 : vector<2x128xf32>
    %cst_5 = arith.constant 0.000000e+00 : f32
    %6 = vector.broadcast %cst_5 : f32 to vector<2x128xf32>
    %7 = arith.maximumf %5, %6 : vector<2x128xf32>
    %c0_6 = arith.constant 0 : index
    %c0_7 = arith.constant 0 : index
    %8 = vector.load %arg4[%c0_6, %c0_7] : memref<128x64xf32, #tpu.memory_space<vmem>>, vector<128x64xf32>
    %cst_8 = arith.constant dense<0.000000e+00> : vector<2x64xf32>
    %9 = tpu.matmul %7, %8, %cst_8 {dimension_numbers = #tpu.dot_dimension_numbers<[1], [0], [0], [1], [0, 0, 1, 1], [], []>} : vector<2x128xf32>, vector<128x64xf32>, vector<2x64xf32> -> vector<2x64xf32>
    %c0_9 = arith.constant 0 : index
    %c0_10 = arith.constant 0 : index
    %10 = vector.load %arg5[%c0_9, %c0_10] : memref<1x64xf32, #tpu.memory_space<vmem>>, vector<1x64xf32>
    %11 = vector.broadcast %10 : vector<1x64xf32> to vector<2x64xf32>
    %12 = arith.addf %9, %11 : vector<2x64xf32>
    %cst_11 = arith.constant 0.000000e+00 : f32
    %13 = vector.broadcast %cst_11 : f32 to vector<2x64xf32>
    %14 = arith.maximumf %12, %13 : vector<2x64xf32>
    %c0_12 = arith.constant 0 : index
    %c0_13 = arith.constant 0 : index
    %15 = vector.load %arg6[%c0_12, %c0_13] : memref<64x64xf32, #tpu.memory_space<vmem>>, vector<64x64xf32>
    %cst_14 = arith.constant dense<0.000000e+00> : vector<2x64xf32>
    %16 = tpu.matmul %14, %15, %cst_14 {dimension_numbers = #tpu.dot_dimension_numbers<[1], [0], [0], [1], [0, 0, 1, 1], [], []>} : vector<2x64xf32>, vector<64x64xf32>, vector<2x64xf32> -> vector<2x64xf32>
    %c0_15 = arith.constant 0 : index
    %c0_16 = arith.constant 0 : index
    %17 = vector.load %arg7[%c0_15, %c0_16] : memref<1x64xf32, #tpu.memory_space<vmem>>, vector<1x64xf32>
    %18 = vector.broadcast %17 : vector<1x64xf32> to vector<2x64xf32>
    %19 = arith.addf %16, %18 : vector<2x64xf32>
    %cst_17 = arith.constant 0.000000e+00 : f32
    %20 = vector.broadcast %cst_17 : f32 to vector<2x64xf32>
    %21 = arith.maximumf %19, %20 : vector<2x64xf32>
    %c0_18 = arith.constant 0 : index
    %c0_19 = arith.constant 0 : index
    %22 = vector.load %arg8[%c0_18, %c0_19] : memref<64x5xf32, #tpu.memory_space<vmem>>, vector<64x5xf32>
    %cst_20 = arith.constant dense<0.000000e+00> : vector<2x5xf32>
    %23 = tpu.matmul %21, %22, %cst_20 {dimension_numbers = #tpu.dot_dimension_numbers<[1], [0], [0], [1], [0, 0, 1, 1], [], []>} : vector<2x64xf32>, vector<64x5xf32>, vector<2x5xf32> -> vector<2x5xf32>
    %c0_21 = arith.constant 0 : index
    %c0_22 = arith.constant 0 : index
    %24 = vector.load %arg9[%c0_21, %c0_22] : memref<1x5xf32, #tpu.memory_space<vmem>>, vector<1x5xf32>
    %25 = vector.broadcast %24 : vector<1x5xf32> to vector<2x5xf32>
    %26 = arith.addf %23, %25 : vector<2x5xf32>
    %27 = vector.extract_strided_slice %26 {offsets = [0, 0], sizes = [2, 4], strides = [1, 1]} : vector<2x5xf32> to vector<2x4xf32>
    %28 = vector.extract_strided_slice %26 {offsets = [0, 4], sizes = [2, 1], strides = [1, 1]} : vector<2x5xf32> to vector<2x1xf32>
    %cst_23 = arith.constant dense<0.000000e+00> : vector<2xf32>
    %29 = vector.multi_reduction <add>, %27, %cst_23 [1] : vector<2x4xf32> to vector<2xf32>
    %30 = vector.shape_cast %29 : vector<2xf32> to vector<2x1xf32>
    %cst_24 = arith.constant 4.000000e+00 : f32
    %31 = vector.broadcast %cst_24 : f32 to vector<2x1xf32>
    %32 = arith.divf %30, %31 : vector<2x1xf32>
    %33 = vector.broadcast %28 : vector<2x1xf32> to vector<2x4xf32>
    %34 = arith.addf %27, %33 : vector<2x4xf32>
    %35 = vector.broadcast %32 : vector<2x1xf32> to vector<2x4xf32>
    %36 = arith.subf %34, %35 : vector<2x4xf32>
    %c0_25 = arith.constant 0 : index
    %c0_26 = arith.constant 0 : index
    %37 = vector.load %arg10[%c0_25, %c0_26] : memref<2x4xf32, #tpu.memory_space<vmem>>, vector<2x4xf32>
    tpu.vector_store %arg10[%c0_25, %c0_26], %36 {strides = array<i32>} : memref<2x4xf32, #tpu.memory_space<vmem>>, vector<2x4xf32>,
    return
  }
  func.func @transform_0(%arg0: i32) -> (i32, i32) {
    %c0_i32 = arith.constant 0 : i32
    %c0_i32_0 = arith.constant 0 : i32
    return %arg0, %c0_i32 : i32, i32
  }
  func.func @transform_1(%arg0: i32) -> (i32, i32) {
    %c0_i32 = arith.constant 0 : i32
    %c0_i32_0 = arith.constant 0 : i32
    %c0_i32_1 = arith.constant 0 : i32
    return %c0_i32, %c0_i32_0 : i32, i32
  }
  func.func @transform_2(%arg0: i32) -> (i32, i32) {
    %c0_i32 = arith.constant 0 : i32
    %c0_i32_0 = arith.constant 0 : i32
    %c0_i32_1 = arith.constant 0 : i32
    return %c0_i32, %c0_i32_0 : i32, i32
  }
  func.func @transform_3(%arg0: i32) -> (i32, i32) {
    %c0_i32 = arith.constant 0 : i32
    %c0_i32_0 = arith.constant 0 : i32
    %c0_i32_1 = arith.constant 0 : i32
    return %c0_i32, %c0_i32_0 : i32, i32
  }
  func.func @transform_4(%arg0: i32) -> (i32, i32) {
    %c0_i32 = arith.constant 0 : i32
    %c0_i32_0 = arith.constant 0 : i32
    %c0_i32_1 = arith.constant 0 : i32
    return %c0_i32, %c0_i32_0 : i32, i32
  }
  func.func @transform_5(%arg0: i32) -> (i32, i32) {
    %c0_i32 = arith.constant 0 : i32
    %c0_i32_0 = arith.constant 0 : i32
    %c0_i32_1 = arith.constant 0 : i32
    return %c0_i32, %c0_i32_0 : i32, i32
  }
  func.func @transform_6(%arg0: i32) -> (i32, i32) {
    %c0_i32 = arith.constant 0 : i32
    %c0_i32_0 = arith.constant 0 : i32
    %c0_i32_1 = arith.constant 0 : i32
    return %c0_i32, %c0_i32_0 : i32, i32
  }
  func.func @transform_7(%arg0: i32) -> (i32, i32) {
    %c0_i32 = arith.constant 0 : i32
    %c0_i32_0 = arith.constant 0 : i32
    %c0_i32_1 = arith.constant 0 : i32
    return %c0_i32, %c0_i32_0 : i32, i32
  }
  func.func @transform_8(%arg0: i32) -> (i32, i32) {
    %c0_i32 = arith.constant 0 : i32
    %c0_i32_0 = arith.constant 0 : i32
    %c0_i32_1 = arith.constant 0 : i32
    return %c0_i32, %c0_i32_0 : i32, i32
  }
  func.func @transform_9(%arg0: i32) -> (i32, i32) {
    %c0_i32 = arith.constant 0 : i32
    %c0_i32_0 = arith.constant 0 : i32
    return %arg0, %c0_i32 : i32, i32
  }
}

</mosaic_0001>

<llo_original>
// kernel: tpu_custom_call.1
$region0: #{tpu_custom_call.1}
  #allocation0 [shape = 'u32[]', space=smem, size = 0x4, offset = 0x4, fixed_abs, tag = 'smem constant byte address 0x4 - core index']
  #allocation1 [shape = 'u32[72,128]{1,0:T(1,128)}', space=vmem, size = 0x9000, scoped, tag = 'internal scratch']
  %s0 = inlined_call_operand.vmem [shape: f32[2,16], index: 0, kind: input, shape index: {}]
  %s1 = inlined_call_operand.vmem [shape: f32[16,128], index: 1, kind: input, shape index: {}]
  %s2 = inlined_call_operand.vmem [shape: f32[1,128], index: 2, kind: input, shape index: {}]
  %s3 = inlined_call_operand.vmem [shape: f32[128,64], index: 3, kind: input, shape index: {}]
  %s4 = inlined_call_operand.vmem [shape: f32[1,64], index: 4, kind: input, shape index: {}]
  %s5 = inlined_call_operand.vmem [shape: f32[64,64], index: 5, kind: input, shape index: {}]
  %s6 = inlined_call_operand.vmem [shape: f32[1,64], index: 6, kind: input, shape index: {}]
  %s7 = inlined_call_operand.vmem [shape: f32[64,5], index: 7, kind: input, shape index: {}]
  %s8 = inlined_call_operand.vmem [shape: f32[1,5], index: 8, kind: input, shape index: {}]
  %s9 = inlined_call_operand.hbm [shape: f32[2,4], index: 9, kind: output, shape index: {}]
  %s10 = sld [smem:[#allocation0]]
  $region46: #{tpu_custom_call.1} parent=0
    _
  %s12 = ssub.s32 1, %s10
  %s13 = scalar_select 0, %s12, %s10
  $region1: #{tpu_custom_call.1} parent=0
    #allocation2 [shape = 'u8[1024]{0}', space=vmem, size = 0x400, scoped, tag = 'output window, operand 0, single buffered']
    #allocation3 [shape = 's32[1]{0}', space=sflag, size = 0x4, scoped, tag = 'scoped memory for tpu_custom_call.1']
    %14 = vsyncpa [#allocation3], 0
    // Predicated region
    $region2: #{tpu_custom_call.1} parent=1 // pred_check
      _
    $region3: #{tpu_custom_call.1} parent=1 // pred_check_branch
      %16 = sbr.rel (0) target = $region5
    $region4: #{tpu_custom_call.1} parent=1 // pred_region
      _
    $region5: #{tpu_custom_call.1} parent=1 // pred_fallthru
      _
    // Predicated region
    $region6: #{tpu_custom_call.1} parent=1 // pred_check
      _
    $region7: #{tpu_custom_call.1} parent=1 // pred_check_branch
      %18 = sbr.rel (0) target = $region9
    $region8: #{tpu_custom_call.1} parent=1 // pred_region
      _
    $region9: #{tpu_custom_call.1} parent=1 // pred_fallthru
      _
    // Predicated region
    $region10: #{tpu_custom_call.1} parent=1 // pred_check
      _
    $region11: #{tpu_custom_call.1} parent=1 // pred_check_branch
      %20 = sbr.rel (0) target = $region13
    $region12: #{tpu_custom_call.1} parent=1 // pred_region
      _
    $region13: #{tpu_custom_call.1} parent=1 // pred_fallthru
      _
    // Predicated region
    $region14: #{tpu_custom_call.1} parent=1 // pred_check
      _
    $region15: #{tpu_custom_call.1} parent=1 // pred_check_branch
      %22 = sbr.rel (0) target = $region17
    $region16: #{tpu_custom_call.1} parent=1 // pred_region
      _
    $region17: #{tpu_custom_call.1} parent=1 // pred_fallthru
      _
    // Predicated region
    $region18: #{tpu_custom_call.1} parent=1 // pred_check
      _
    $region19: #{tpu_custom_call.1} parent=1 // pred_check_branch
      %24 = sbr.rel (0) target = $region21
    $region20: #{tpu_custom_call.1} parent=1 // pred_region
      _
    $region21: #{tpu_custom_call.1} parent=1 // pred_fallthru
      _
    // Predicated region
    $region22: #{tpu_custom_call.1} parent=1 // pred_check
      _
    $region23: #{tpu_custom_call.1} parent=1 // pred_check_branch
      %26 = sbr.rel (0) target = $region25
    $region24: #{tpu_custom_call.1} parent=1 // pred_region
      _
    $region25: #{tpu_custom_call.1} parent=1 // pred_fallthru
      _
    // Predicated region
    $region26: #{tpu_custom_call.1} parent=1 // pred_check
      _
    $region27: #{tpu_custom_call.1} parent=1 // pred_check_branch
      %28 = sbr.rel (0) target = $region29
    $region28: #{tpu_custom_call.1} parent=1 // pred_region
      _
    $region29: #{tpu_custom_call.1} parent=1 // pred_fallthru
      _
    // Predicated region
    $region30: #{tpu_custom_call.1} parent=1 // pred_check
      _
    $region31: #{tpu_custom_call.1} parent=1 // pred_check_branch
      %30 = sbr.rel (0) target = $region33
    $region32: #{tpu_custom_call.1} parent=1 // pred_region
      _
    $region33: #{tpu_custom_call.1} parent=1 // pred_fallthru
      _
    // Predicated region
    $region34: #{tpu_custom_call.1} parent=1 // pred_check
      _
    $region35: #{tpu_custom_call.1} parent=1 // pred_check_branch
      %32 = sbr.rel (0) target = $region37
    $region36: #{tpu_custom_call.1} parent=1 // pred_region
      _
    $region37: #{tpu_custom_call.1} parent=1 // pred_fallthru
      _
    %v33 = vld [vmem:[%s0] sm:$0x3]
    %v34 = vld [vmem:[%s1] sm:$0xff]
    %v35 = vld [vmem:[%s1 + $0x8] sm:$0xff]
    %v36 = vld [vmem:[%s2] sm:$0x1]
    %v38 = vperm.slane %v36, 0
    %vm40 = vcmask 130048
    %v42 = vsel %vm40, %v33, 0
    %44 = vmatpush.msra.mxu0 0.0
    %45 = vmatpush.msra.mxu0 0.0
    %46 = vmatpush.msra.mxu0 0.0
    %47 = vmatpush.msra.mxu0 0.0
    %48 = vmatpush.msra.mxu0 0.0
    %49 = vmatpush.msra.mxu0 0.0
    %50 = vmatpush.msra.mxu0 0.0
    %51 = vmatpush.msra.mxu0 0.0
    %52 = vmatpush.msra.mxu0 0.0
    %53 = vmatpush.msra.mxu0 0.0
    %54 = vmatpush.msra.mxu0 0.0
    %55 = vmatpush.msra.mxu0 0.0
    %56 = vmatpush.msra.mxu0 0.0
    %57 = vmatpush.msra.mxu0 0.0
    %58 = vmatpush.msra.mxu0 %v35
    %59 = vmatpush.msra.mxu0 %v34
    %60 = vmatmul.f32.gmra.mxu0 %v42
    %v61 = vpop.f32.mrf.mxu0
    %v62 = vadd.f32 %v38, %v61
    %63 = vdwg.mxu0
    %v64 = vmax.f32 %v62, 0.0
    %v65 = vld [vmem:[%s3] sm:$0xff]
    %v66 = vld [vmem:[%s3 + $0x8] sm:$0xff]
    %v67 = vld [vmem:[%s3 + $0x10] sm:$0xff]
    %v68 = vld [vmem:[%s3 + $0x18] sm:$0xff]
    %v69 = vld [vmem:[%s3 + $0x20] sm:$0xff]
    %v70 = vld [vmem:[%s3 + $0x28] sm:$0xff]
    %v71 = vld [vmem:[%s3 + $0x30] sm:$0xff]
    %v72 = vld [vmem:[%s3 + $0x38] sm:$0xff]
    %v73 = vld [vmem:[%s3 + $0x40] sm:$0xff]
    %v74 = vld [vmem:[%s3 + $0x48] sm:$0xff]
    %v75 = vld [vmem:[%s3 + $0x50] sm:$0xff]
    %v76 = vld [vmem:[%s3 + $0x58] sm:$0xff]
    %v77 = vld [vmem:[%s3 + $0x60] sm:$0xff]
    %v78 = vld [vmem:[%s3 + $0x68] sm:$0xff]
    %v79 = vld [vmem:[%s3 + $0x70] sm:$0xff]
    %v80 = vld [vmem:[%s3 + $0x78] sm:$0xff]
    %v81 = vld [vmem:[%s4] sm:$0x1]
    %v83 = vperm.slane %v81, 0
    %85 = vmatpush.msra.mxu0 %v80
    %86 = vmatpush.msra.mxu0 %v79
    %87 = vmatpush.msra.mxu0 %v78
    %88 = vmatpush.msra.mxu0 %v77
    %89 = vmatpush.msra.mxu0 %v76
    %90 = vmatpush.msra.mxu0 %v75
    %91 = vmatpush.msra.mxu0 %v74
    %92 = vmatpush.msra.mxu0 %v73
    %93 = vmatpush.msra.mxu0 %v72
    %94 = vmatpush.msra.mxu0 %v71
    %95 = vmatpush.msra.mxu0 %v70
    %96 = vmatpush.msra.mxu0 %v69
    %97 = vmatpush.msra.mxu0 %v68
    %98 = vmatpush.msra.mxu0 %v67
    %99 = vmatpush.msra.mxu0 %v66
    %100 = vmatpush.msra.mxu0 %v65
    %101 = vmatmul.f32.gmra.mxu0 %v64
    %v102 = vpop.f32.mrf.mxu0
    %v103 = vadd.f32 %v83, %v102
    %104 = vdwg.mxu0
    %v105 = vmax.f32 %v103, 0.0
    %v106 = vld [vmem:[%s5] sm:$0xff]
    %v107 = vld [vmem:[%s5 + $0x8] sm:$0xff]
    %v108 = vld [vmem:[%s5 + $0x10] sm:$0xff]
    %v109 = vld [vmem:[%s5 + $0x18] sm:$0xff]
    %v110 = vld [vmem:[%s5 + $0x20] sm:$0xff]
    %v111 = vld [vmem:[%s5 + $0x28] sm:$0xff]
    %v112 = vld [vmem:[%s5 + $0x30] sm:$0xff]
    %v113 = vld [vmem:[%s5 + $0x38] sm:$0xff]
    %v114 = vld [vmem:[%s6] sm:$0x1]
    %v116 = vperm.slane %v114, 0
    %vm118 = vcmask 523264
    %v120 = vsel %vm118, %v105, 0
    %122 = vmatpush.msra.mxu0 0.0
    %123 = vmatpush.msra.mxu0 0.0
    %124 = vmatpush.msra.mxu0 0.0
    %125 = vmatpush.msra.mxu0 0.0
    %126 = vmatpush.msra.mxu0 0.0
    %127 = vmatpush.msra.mxu0 0.0
    %128 = vmatpush.msra.mxu0 0.0
    %129 = vmatpush.msra.mxu0 0.0
    %130 = vmatpush.msra.mxu0 %v113
    %131 = vmatpush.msra.mxu0 %v112
    %132 = vmatpush.msra.mxu0 %v111
    %133 = vmatpush.msra.mxu0 %v110
    %134 = vmatpush.msra.mxu0 %v109
    %135 = vmatpush.msra.mxu0 %v108
    %136 = vmatpush.msra.mxu0 %v107
    %137 = vmatpush.msra.mxu0 %v106
    %138 = vmatmul.f32.gmra.mxu0 %v120
    %v139 = vpop.f32.mrf.mxu0
    %v140 = vadd.f32 %v116, %v139
    %141 = vdwg.mxu0
    %v142 = vmax.f32 %v140, 0.0
    %v143 = vld [vmem:[%s7] sm:$0xff]
    %v144 = vld [vmem:[%s7 + $0x8] sm:$0xff]
    %v145 = vld [vmem:[%s7 + $0x10] sm:$0xff]
    %v146 = vld [vmem:[%s7 + $0x18] sm:$0xff]
    %v147 = vld [vmem:[%s7 + $0x20] sm:$0xff]
    %v148 = vld [vmem:[%s7 + $0x28] sm:$0xff]
    %v149 = vld [vmem:[%s7 + $0x30] sm:$0xff]
    %v150 = vld [vmem:[%s7 + $0x38] sm:$0xff]
    %v151 = vld [vmem:[%s8] sm:$0x1]
    %v153 = vperm.slane %v151, 0
    %v156 = vsel %vm118, %v142, 0
    %158 = vmatpush.msra.mxu0 0.0
    %159 = vmatpush.msra.mxu0 0.0
    %160 = vmatpush.msra.mxu0 0.0
    %161 = vmatpush.msra.mxu0 0.0
    %162 = vmatpush.msra.mxu0 0.0
    %163 = vmatpush.msra.mxu0 0.0
    %164 = vmatpush.msra.mxu0 0.0
    %165 = vmatpush.msra.mxu0 0.0
    %166 = vmatpush.msra.mxu0 %v150
    %167 = vmatpush.msra.mxu0 %v149
    %168 = vmatpush.msra.mxu0 %v148
    %169 = vmatpush.msra.mxu0 %v147
    %170 = vmatpush.msra.mxu0 %v146
    %171 = vmatpush.msra.mxu0 %v145
    %172 = vmatpush.msra.mxu0 %v144
    %173 = vmatpush.msra.mxu0 %v143
    %174 = vmatmul.f32.gmra.mxu0 %v156
    %v175 = vpop.f32.mrf.mxu0
    %v176 = vadd.f32 %v153, %v175
    %177 = vdwg.mxu0
    %vm178 = vcmask 25600
    %v179 = vsel %vm178, %v176, 0.0
    %180 = vadd.xlane.f32.xlu0 %v179
    %v181 = vpop.xlane.xlu0 %180
    %v182 = vrcp.pop 4.0
    %v183 = vmul.f32 4.0, %v182
    %v184 = vsub.f32 1.0, %v183
    %v185 = vmul.f32 %v182, %v184
    %v186 = vadd.f32 %v182, %v185
    %vm187 = vweird.f32 %v182
    %v188 = vsel %vm187, %v182, %v186
    %v189 = vmul.f32 %v181, %v188
    %191 = vset.pattern.permute.xlu0 4
    %192 = vperm.xlu0 %191, %v176
    %v193 = vpop.permute.xlu0 %192
    %v195 = vadd.f32 %v176, %v193
    %v196 = vsub.f32 %v195, %v189
    %197 = vst.msk [vmem:[#allocation2] sm:$0x3] %vm178, %v196
    // Predicated region
    $region38: #{tpu_custom_call.1} parent=1 // pred_check
      _
    $region39: #{tpu_custom_call.1} parent=1 // pred_check_branch
      %199 = sbr.rel (0) target = $region41
    $region40: #{tpu_custom_call.1} parent=1 // pred_region
      %201 = vsyncadd [#allocation3], 0
      %s203 = sshll.u32 [#allocation2], 4
      %s204 = int_to_ptr.vmem [resolvable:$true] %s203
      %s205 = sshll.u32 %s9, 4
      %s206 = int_to_ptr.hbm [resolvable:$true] %s205
      %208 = dma.vmem_to_hbm [thread:$0]  %s204, 32, %s206, [#allocation3]
    $region41: #{tpu_custom_call.1} parent=1 // pred_fallthru
      _
    // Predicated region
    $region42: #{tpu_custom_call.1} parent=1 // pred_check
      _
    $region43: #{tpu_custom_call.1} parent=1 // pred_check_branch
      %210 = sbr.rel (0) target = $region45
    $region44: #{tpu_custom_call.1} parent=1 // pred_region
      %212 = dma.done [#allocation3], 32
    $region45: #{tpu_custom_call.1} parent=1 // pred_fallthru
      _
    %213 = vsyncpa [#allocation3], 1

</llo_original>
